<compile_context>
chip_gen: v5e
topology: v5e:2x2
jax: 0.10.0
libtpu: 0.0.40
codegen_flags: <defaults>
</compile_context>

<pallas_src>
import functools

import jax
import jax.numpy as jnp
from jax.experimental import pallas as pl
from jax.experimental.pallas import tpu as pltpu


def _round_up(n, m):
    return ((n + m - 1) // m) * m


def _cdiv(a, b):
    return (a + b - 1) // b


def _mlp_kernel(x_ref, w1_ref, b1_ref, w2_ref, b2_ref, o_ref):
    # In-kernel f32 -> bf16 cast of the streamed activations (hidden under DMA).
    x = x_ref[...].astype(jnp.bfloat16)
    # fc1: (TB, in) @ (in, hid) -> f32 accumulate, + bias, ReLU.
    h = jnp.dot(x, w1_ref[...], preferred_element_type=jnp.float32)
    h = jnp.maximum(h + b1_ref[...], 0.0)
    # fc2: (TB, hid) @ (hid, out) -> f32 accumulate, + bias.
    y = jnp.dot(h.astype(jnp.bfloat16), w2_ref[...],
                preferred_element_type=jnp.float32)
    o_ref[...] = (y + b2_ref[...]).astype(o_ref.dtype)


@functools.partial(jax.jit, static_argnames=("block_b",))
def skin_condition_model(x, w1, b1, w2, b2, *, block_b=2048):
    """Pallas forward pass of SkinConditionModel.

    x  : (B, input_size)            float32
    w1 : (input_size, hidden)       float32   (transposed vs nn.Linear.weight)
    b1 : (hidden,) or (1, hidden)   float32
    w2 : (hidden, output_size)      float32   (transposed vs nn.Linear.weight)
    b2 : (output,) or (1, output)   float32
    returns (B, output_size)        float32
    """
    B, in_dim = x.shape
    hid = w1.shape[1]
    out_dim = w2.shape[1]

    b1 = b1.reshape(1, hid).astype(jnp.float32)
    b2 = b2.reshape(1, out_dim).astype(jnp.float32)

    # One-time weight casts to bf16 (tiny arrays; fine in the wrapper).
    w1_16 = w1.astype(jnp.bfloat16)
    w2_16 = w2.astype(jnp.bfloat16)

    # --- Batch tile selection ---------------------------------------------
    # Cap the tile so (double-buffered x + out tiles) + f32 h scratch stay
    # comfortably inside VMEM on every generation (incl. v7x's 64 MiB).
    row_bytes = 4 * (2 * in_dim + 2 * out_dim + hid)
    vmem_budget = 16 * 1024 * 1024
    tb_cap = max(8, (vmem_budget // max(row_bytes, 1)) // 8 * 8)
    eff_block_b = max(8, min(block_b, tb_cap))

    # At least 2 grid steps when the batch is big enough so the "parallel"
    # batch axis shards across both TensorCores on v7x (free on v5e/v6e).
    min_steps = 2 if B >= 16 else 1
    n_steps = max(_cdiv(B, eff_block_b), min_steps)
    tb = _round_up(_cdiv(B, n_steps), 8)
    b_padded = n_steps * tb

    if b_padded != B:
        # Small remainder-only pad (at most ~8 rows per grid step).
        x = jnp.pad(x, ((0, b_padded - B), (0, 0)))
    grid = (n_steps,)

    flops = 2 * B * (in_dim * hid + hid * out_dim)
    bytes_accessed = (
        B * in_dim * 4            # x (f32, streamed)
        + w1_16.size * 2 + w2_16.size * 2   # bf16 weights (resident)
        + b1.size * 4 + b2.size * 4         # f32 biases (resident)
        + B * out_dim * 4         # output (f32, unpadded)
    )

    y = pl.pallas_call(
        _mlp_kernel,
        out_shape=jax.ShapeDtypeStruct((b_padded, out_dim), jnp.float32),
        grid=grid,
        in_specs=[
            pl.BlockSpec((tb, in_dim), lambda i: (i, 0)),    # x: tiled over batch
            pl.BlockSpec((in_dim, hid), lambda i: (0, 0)),   # W1: VMEM-resident
            pl.BlockSpec((1, hid), lambda i: (0, 0)),        # b1: VMEM-resident
            pl.BlockSpec((hid, out_dim), lambda i: (0, 0)),  # W2: VMEM-resident
            pl.BlockSpec((1, out_dim), lambda i: (0, 0)),    # b2: VMEM-resident
        ],
        out_specs=pl.BlockSpec((tb, out_dim), lambda i: (i, 0)),
        compiler_params=pltpu.CompilerParams(
            dimension_semantics=("parallel",),
            vmem_limit_bytes=32 * 1024 * 1024,
        ),
        cost_estimate=pl.CostEstimate(
            flops=flops, transcendentals=0, bytes_accessed=bytes_accessed),
    )(x, w1_16, b1, w2_16, b2)

    return y[:B] if b_padded != B else y


def reference_forward_f32(x, w1, b1, w2, b2):
    h = jnp.maximum(x @ w1 + b1, 0.0)
    return h @ w2 + b2


def reference_forward_bf16(x, w1, b1, w2, b2):
    # Matches the kernel's numerics: bf16 operands, f32 accumulation/bias.
    h = jnp.dot(x.astype(jnp.bfloat16), w1.astype(jnp.bfloat16),
                preferred_element_type=jnp.float32) + b1
    h = jnp.maximum(h, 0.0)
    y = jnp.dot(h.astype(jnp.bfloat16), w2.astype(jnp.bfloat16),
                preferred_element_type=jnp.float32) + b2
    return y


if __name__ == "__main__":
    # Small synthetic sizes consistent with the module's forward:
    # input_size = #unique ingredients, hidden_size = 256, output_size = #products.
    batch = 8
    input_size = 64
    hidden_size = 256
    output_size = 32

    key = jax.random.PRNGKey(0)
    kx, k1, kb1, k2, kb2 = jax.random.split(key, 5)

    bound1 = 1.0 / (input_size ** 0.5)
    bound2 = 1.0 / (hidden_size ** 0.5)
    x = jax.random.normal(kx, (batch, input_size), dtype=jnp.float32)
    w1 = jax.random.uniform(k1, (input_size, hidden_size), jnp.float32, -bound1, bound1)
    b1 = jax.random.uniform(kb1, (1, hidden_size), jnp.float32, -bound1, bound1)
    w2 = jax.random.uniform(k2, (hidden_size, output_size), jnp.float32, -bound2, bound2)
    b2 = jax.random.uniform(kb2, (1, output_size), jnp.float32, -bound2, bound2)

    out = skin_condition_model(x, w1, b1, w2, b2)
    out = jax.block_until_ready(out)
    assert out.shape == (batch, output_size)

    # Tight check vs. a numerically-equivalent bf16 reference.
    ref16 = reference_forward_bf16(x, w1, b1, w2, b2)
    assert jnp.allclose(out, ref16, atol=2e-3, rtol=2e-3), "mismatch vs bf16 reference"

    # Loose sanity check vs. the pure-fp32 reference (bf16 rounding tolerance).
    ref32 = reference_forward_f32(x, w1, b1, w2, b2)
    assert jnp.allclose(out, ref32, atol=5e-2, rtol=5e-2), "mismatch vs fp32 reference"

    print("KERNEL_OK")
</pallas_src>

<mosaic_0001>
module attributes {stable_mosaic.version = 11 : i64} {
  func.func @_mlp_kernel(%arg0: i32, %arg1: memref<8x64xf32, #tpu.memory_space<vmem>>, %arg2: memref<64x256xbf16, #tpu.memory_space<vmem>>, %arg3: memref<1x256xf32, #tpu.memory_space<vmem>>, %arg4: memref<256x32xbf16, #tpu.memory_space<vmem>>, %arg5: memref<1x32xf32, #tpu.memory_space<vmem>>, %arg6: memref<8x32xf32, #tpu.memory_space<vmem>>) attributes {dimension_semantics = [#tpu.dimension_semantics<parallel>], iteration_bounds = array<i64: 1>, scalar_prefetch = 0 : i64, scratch_operands = 0 : i64, tpu.core_type = #tpu.core_type<tc>, window_params = [{transform_indices = @transform_0, window_bounds = array<i64: 8, 64>}, {pipeline_mode = #tpu.pipeline_mode<synchronous>, transform_indices = @transform_1, window_bounds = array<i64: 64, 256>}, {pipeline_mode = #tpu.pipeline_mode<synchronous>, transform_indices = @transform_2, window_bounds = array<i64: 1, 256>}, {pipeline_mode = #tpu.pipeline_mode<synchronous>, transform_indices = @transform_3, window_bounds = array<i64: 256, 32>}, {pipeline_mode = #tpu.pipeline_mode<synchronous>, transform_indices = @transform_4, window_bounds = array<i64: 1, 32>}, {transform_indices = @transform_5, window_bounds = array<i64: 8, 32>}]} {
    %c0 = arith.constant 0 : index
    %c0_0 = arith.constant 0 : index
    %0 = vector.load %arg1[%c0, %c0_0] : memref<8x64xf32, #tpu.memory_space<vmem>>, vector<8x64xf32>
    %1 = arith.truncf %0 : vector<8x64xf32> to vector<8x64xbf16>
    %c0_1 = arith.constant 0 : index
    %c0_2 = arith.constant 0 : index
    %2 = vector.load %arg2[%c0_1, %c0_2] : memref<64x256xbf16, #tpu.memory_space<vmem>>, vector<64x256xbf16>
    %cst = arith.constant dense<0.000000e+00> : vector<8x256xf32>
    %3 = tpu.matmul %1, %2, %cst {dimension_numbers = #tpu.dot_dimension_numbers<[1], [0], [0], [1], [0, 0, 1, 1], [], []>} : vector<8x64xbf16>, vector<64x256xbf16>, vector<8x256xf32> -> vector<8x256xf32>
    %c0_3 = arith.constant 0 : index
    %c0_4 = arith.constant 0 : index
    %4 = vector.load %arg3[%c0_3, %c0_4] : memref<1x256xf32, #tpu.memory_space<vmem>>, vector<1x256xf32>
    %5 = vector.broadcast %4 : vector<1x256xf32> to vector<8x256xf32>
    %6 = arith.addf %3, %5 : vector<8x256xf32>
    %cst_5 = arith.constant 0.000000e+00 : f32
    %7 = vector.broadcast %cst_5 : f32 to vector<8x256xf32>
    %8 = arith.maximumf %6, %7 : vector<8x256xf32>
    %9 = arith.truncf %8 : vector<8x256xf32> to vector<8x256xbf16>
    %c0_6 = arith.constant 0 : index
    %c0_7 = arith.constant 0 : index
    %10 = vector.load %arg4[%c0_6, %c0_7] : memref<256x32xbf16, #tpu.memory_space<vmem>>, vector<256x32xbf16>
    %cst_8 = arith.constant dense<0.000000e+00> : vector<8x32xf32>
    %11 = tpu.matmul %9, %10, %cst_8 {dimension_numbers = #tpu.dot_dimension_numbers<[1], [0], [0], [1], [0, 0, 1, 1], [], []>} : vector<8x256xbf16>, vector<256x32xbf16>, vector<8x32xf32> -> vector<8x32xf32>
    %c0_9 = arith.constant 0 : index
    %c0_10 = arith.constant 0 : index
    %12 = vector.load %arg5[%c0_9, %c0_10] : memref<1x32xf32, #tpu.memory_space<vmem>>, vector<1x32xf32>
    %13 = vector.broadcast %12 : vector<1x32xf32> to vector<8x32xf32>
    %14 = arith.addf %11, %13 : vector<8x32xf32>
    %c0_11 = arith.constant 0 : index
    %c0_12 = arith.constant 0 : index
    %15 = vector.load %arg6[%c0_11, %c0_12] : memref<8x32xf32, #tpu.memory_space<vmem>>, vector<8x32xf32>
    tpu.vector_store %arg6[%c0_11, %c0_12], %14 {strides = array<i32>} : memref<8x32xf32, #tpu.memory_space<vmem>>, vector<8x32xf32>,
    return
  }
  func.func @transform_0(%arg0: i32) -> (i32, i32) {
    %c0_i32 = arith.constant 0 : i32
    %c0_i32_0 = arith.constant 0 : i32
    return %arg0, %c0_i32 : i32, i32
  }
  func.func @transform_1(%arg0: i32) -> (i32, i32) {
    %c0_i32 = arith.constant 0 : i32
    %c0_i32_0 = arith.constant 0 : i32
    %c0_i32_1 = arith.constant 0 : i32
    return %c0_i32, %c0_i32_0 : i32, i32
  }
  func.func @transform_2(%arg0: i32) -> (i32, i32) {
    %c0_i32 = arith.constant 0 : i32
    %c0_i32_0 = arith.constant 0 : i32
    %c0_i32_1 = arith.constant 0 : i32
    return %c0_i32, %c0_i32_0 : i32, i32
  }
  func.func @transform_3(%arg0: i32) -> (i32, i32) {
    %c0_i32 = arith.constant 0 : i32
    %c0_i32_0 = arith.constant 0 : i32
    %c0_i32_1 = arith.constant 0 : i32
    return %c0_i32, %c0_i32_0 : i32, i32
  }
  func.func @transform_4(%arg0: i32) -> (i32, i32) {
    %c0_i32 = arith.constant 0 : i32
    %c0_i32_0 = arith.constant 0 : i32
    %c0_i32_1 = arith.constant 0 : i32
    return %c0_i32, %c0_i32_0 : i32, i32
  }
  func.func @transform_5(%arg0: i32) -> (i32, i32) {
    %c0_i32 = arith.constant 0 : i32
    %c0_i32_0 = arith.constant 0 : i32
    return %arg0, %c0_i32 : i32, i32
  }
}

</mosaic_0001>

<llo_original>
// kernel: skin_condition_model.1
$region0: #{skin_condition_model.1}
  #allocation0 [shape = 'u32[]', space=smem, size = 0x4, offset = 0x4, fixed_abs, tag = 'smem constant byte address 0x4 - core index']
  #allocation1 [shape = 'u32[72,128]{1,0:T(1,128)}', space=vmem, size = 0x9000, scoped, tag = 'internal scratch']
  %s0 = inlined_call_operand.vmem [shape: f32[8,64], index: 0, kind: input, shape index: {}]
  %s1 = inlined_call_operand.vmem [shape: bf16[64,256], index: 1, kind: input, shape index: {}]
  %s2 = inlined_call_operand.vmem [shape: f32[1,256], index: 2, kind: input, shape index: {}]
  %s3 = inlined_call_operand.vmem [shape: bf16[256,32], index: 3, kind: input, shape index: {}]
  %s4 = inlined_call_operand.vmem [shape: f32[1,32], index: 4, kind: input, shape index: {}]
  %s5 = inlined_call_operand.hbm [shape: f32[8,32], index: 5, kind: output, shape index: {}]
  %s6 = sld [smem:[#allocation0]]
  $region30: #{skin_condition_model.1} parent=0
    _
  %s8 = ssub.s32 1, %s6
  %s9 = scalar_select 0, %s8, %s6
  $region1: #{skin_condition_model.1} parent=0
    #allocation2 [shape = 'u8[4096]{0}', space=vmem, size = 0x1000, scoped, tag = 'output window, operand 0, single buffered']
    #allocation3 [shape = 's32[1]{0}', space=sflag, size = 0x4, scoped, tag = 'scoped memory for skin_condition_model.1']
    %10 = vsyncpa [#allocation3], 0
    // Predicated region
    $region2: #{skin_condition_model.1} parent=1 // pred_check
      _
    $region3: #{skin_condition_model.1} parent=1 // pred_check_branch
      %12 = sbr.rel (0) target = $region5
    $region4: #{skin_condition_model.1} parent=1 // pred_region
      _
    $region5: #{skin_condition_model.1} parent=1 // pred_fallthru
      _
    // Predicated region
    $region6: #{skin_condition_model.1} parent=1 // pred_check
      _
    $region7: #{skin_condition_model.1} parent=1 // pred_check_branch
      %14 = sbr.rel (0) target = $region9
    $region8: #{skin_condition_model.1} parent=1 // pred_region
      _
    $region9: #{skin_condition_model.1} parent=1 // pred_fallthru
      _
    // Predicated region
    $region10: #{skin_condition_model.1} parent=1 // pred_check
      _
    $region11: #{skin_condition_model.1} parent=1 // pred_check_branch
      %16 = sbr.rel (0) target = $region13
    $region12: #{skin_condition_model.1} parent=1 // pred_region
      _
    $region13: #{skin_condition_model.1} parent=1 // pred_fallthru
      _
    // Predicated region
    $region14: #{skin_condition_model.1} parent=1 // pred_check
      _
    $region15: #{skin_condition_model.1} parent=1 // pred_check_branch
      %18 = sbr.rel (0) target = $region17
    $region16: #{skin_condition_model.1} parent=1 // pred_region
      _
    $region17: #{skin_condition_model.1} parent=1 // pred_fallthru
      _
    // Predicated region
    $region18: #{skin_condition_model.1} parent=1 // pred_check
      _
    $region19: #{skin_condition_model.1} parent=1 // pred_check_branch
      %20 = sbr.rel (0) target = $region21
    $region20: #{skin_condition_model.1} parent=1 // pred_region
      _
    $region21: #{skin_condition_model.1} parent=1 // pred_fallthru
      _
    %v22 = vld [vmem:[%s0] sm:$0xff]
    %v23 = vpack.c.bf16 %v22, %v22
    %v24 = vld [vmem:[%s1] sm:$0xff]
    %v25 = vld [vmem:[%s1 + $0x8] sm:$0xff]
    %v26 = vld [vmem:[%s1 + $0x10] sm:$0xff]
    %v27 = vld [vmem:[%s1 + $0x18] sm:$0xff]
    %v28 = vld [vmem:[%s1 + $0x20] sm:$0xff]
    %v29 = vld [vmem:[%s1 + $0x28] sm:$0xff]
    %v30 = vld [vmem:[%s1 + $0x30] sm:$0xff]
    %v31 = vld [vmem:[%s1 + $0x38] sm:$0xff]
    %v32 = vld [vmem:[%s2] sm:$0x3]
    %v34 = vperm.slane %v32, 0
    %v35 = vperm.slane %v32, 1
    %v46 = vunpack.c.l.b16 %v24
    %v47 = vunpack.c.h.b16 %v24
    %v48 = vunpack.c.l.b16 %v25
    %v49 = vunpack.c.h.b16 %v25
    %v50 = vunpack.c.l.b16 %v26
    %v51 = vunpack.c.h.b16 %v26
    %v52 = vunpack.c.l.b16 %v27
    %v53 = vunpack.c.h.b16 %v27
    %v54 = vunpack.c.l.b16 %v28
    %v55 = vunpack.c.h.b16 %v28
    %v56 = vunpack.c.l.b16 %v29
    %v57 = vunpack.c.h.b16 %v29
    %v58 = vunpack.c.l.b16 %v30
    %v59 = vunpack.c.h.b16 %v30
    %v60 = vunpack.c.l.b16 %v31
    %v61 = vunpack.c.h.b16 %v31
    %v62 = vpack.c.b16 %v48, %v46
    %v63 = vpack.c.b16 %v49, %v47
    %v64 = vpack.c.b16 %v52, %v50
    %v65 = vpack.c.b16 %v53, %v51
    %v66 = vpack.c.b16 %v56, %v54
    %v67 = vpack.c.b16 %v57, %v55
    %v68 = vpack.c.b16 %v60, %v58
    %v69 = vpack.c.b16 %v61, %v59
    %vm78 = vcmask 523264
    %v80 = vsel %vm78, %v23, 0
    %82 = vmatpush.bf16.msra.mxu0 0
    %83 = vmatpush.bf16.msra.mxu0 0
    %84 = vmatpush.bf16.msra.mxu0 0
    %85 = vmatpush.bf16.msra.mxu0 0
    %86 = vmatpush.bf16.msra.mxu0 %v68
    %87 = vmatpush.bf16.msra.mxu0 %v66
    %88 = vmatpush.bf16.msra.mxu0 %v64
    %89 = vmatpush.bf16.msra.mxu0 %v62
    %90 = vmatmul.bf16.gmra.mxu0 %v80
    %v91 = vpop.f32.mrf.mxu0
    %v92 = vadd.f32 %v34, %v91
    %v93 = vpop.f32.mrf.mxu0
    %94 = vdwg.mxu0
    %95 = vmatpush.bf16.msra.mxu0 0
    %96 = vmatpush.bf16.msra.mxu0 0
    %97 = vmatpush.bf16.msra.mxu0 0
    %98 = vmatpush.bf16.msra.mxu0 0
    %99 = vmatpush.bf16.msra.mxu0 %v69
    %100 = vmatpush.bf16.msra.mxu0 %v67
    %101 = vmatpush.bf16.msra.mxu0 %v65
    %102 = vmatpush.bf16.msra.mxu0 %v63
    %103 = vmatmul.bf16.gmra.mxu0 %v80
    %v104 = vpop.f32.mrf.mxu0
    %v105 = vadd.f32 %v35, %v104
    %v106 = vpop.f32.mrf.mxu0
    %107 = vdwg.mxu0
    %v108 = vmax.f32 %v92, 0.0
    %v109 = vmax.f32 %v105, 0.0
    %v110 = vpack.c.bf16 %v108, %v108
    %v111 = vpack.c.bf16 %v109, %v109
    %v112 = vld [vmem:[%s3] sm:$0xf]
    %v113 = vld [vmem:[%s3 + $0x4] sm:$0xf]
    %v114 = vld [vmem:[%s3 + $0x8] sm:$0xf]
    %v115 = vld [vmem:[%s3 + $0xc] sm:$0xf]
    %v116 = vld [vmem:[%s3 + $0x10] sm:$0xf]
    %v117 = vld [vmem:[%s3 + $0x14] sm:$0xf]
    %v118 = vld [vmem:[%s3 + $0x18] sm:$0xf]
    %v119 = vld [vmem:[%s3 + $0x1c] sm:$0xf]
    %v120 = vld [vmem:[%s3 + $0x20] sm:$0xf]
    %v121 = vld [vmem:[%s3 + $0x24] sm:$0xf]
    %v122 = vld [vmem:[%s3 + $0x28] sm:$0xf]
    %v123 = vld [vmem:[%s3 + $0x2c] sm:$0xf]
    %v124 = vld [vmem:[%s3 + $0x30] sm:$0xf]
    %v125 = vld [vmem:[%s3 + $0x34] sm:$0xf]
    %v126 = vld [vmem:[%s3 + $0x38] sm:$0xf]
    %v127 = vld [vmem:[%s3 + $0x3c] sm:$0xf]
    %v128 = vld [vmem:[%s3 + $0x40] sm:$0xf]
    %v129 = vld [vmem:[%s3 + $0x44] sm:$0xf]
    %v130 = vld [vmem:[%s3 + $0x48] sm:$0xf]
    %v131 = vld [vmem:[%s3 + $0x4c] sm:$0xf]
    %v132 = vld [vmem:[%s3 + $0x50] sm:$0xf]
    %v133 = vld [vmem:[%s3 + $0x54] sm:$0xf]
    %v134 = vld [vmem:[%s3 + $0x58] sm:$0xf]
    %v135 = vld [vmem:[%s3 + $0x5c] sm:$0xf]
    %v136 = vld [vmem:[%s3 + $0x60] sm:$0xf]
    %v137 = vld [vmem:[%s3 + $0x64] sm:$0xf]
    %v138 = vld [vmem:[%s3 + $0x68] sm:$0xf]
    %v139 = vld [vmem:[%s3 + $0x6c] sm:$0xf]
    %v140 = vld [vmem:[%s3 + $0x70] sm:$0xf]
    %v141 = vld [vmem:[%s3 + $0x74] sm:$0xf]
    %v142 = vld [vmem:[%s3 + $0x78] sm:$0xf]
    %v143 = vld [vmem:[%s3 + $0x7c] sm:$0xf]
    %v144 = vld [vmem:[%s4] sm:$0x1]
    %v146 = vperm.slane %v144, 0
    %v180 = vunpack.c.l.b16 %v112
    %v181 = vunpack.c.l.b16 %v113
    %v182 = vunpack.c.l.b16 %v114
    %v183 = vunpack.c.l.b16 %v115
    %v184 = vunpack.c.l.b16 %v116
    %v185 = vunpack.c.l.b16 %v117
    %v186 = vunpack.c.l.b16 %v118
    %v187 = vunpack.c.l.b16 %v119
    %v188 = vunpack.c.l.b16 %v120
    %v189 = vunpack.c.l.b16 %v121
    %v190 = vunpack.c.l.b16 %v122
    %v191 = vunpack.c.l.b16 %v123
    %v192 = vunpack.c.l.b16 %v124
    %v193 = vunpack.c.l.b16 %v125
    %v194 = vunpack.c.l.b16 %v126
    %v195 = vunpack.c.l.b16 %v127
    %v196 = vunpack.c.l.b16 %v128
    %v197 = vunpack.c.l.b16 %v129
    %v198 = vunpack.c.l.b16 %v130
    %v199 = vunpack.c.l.b16 %v131
    %v200 = vunpack.c.l.b16 %v132
    %v201 = vunpack.c.l.b16 %v133
    %v202 = vunpack.c.l.b16 %v134
    %v203 = vunpack.c.l.b16 %v135
    %v204 = vunpack.c.l.b16 %v136
    %v205 = vunpack.c.l.b16 %v137
    %v206 = vunpack.c.l.b16 %v138
    %v207 = vunpack.c.l.b16 %v139
    %v208 = vunpack.c.l.b16 %v140
    %v209 = vunpack.c.l.b16 %v141
    %v210 = vunpack.c.l.b16 %v142
    %v211 = vunpack.c.l.b16 %v143
    %v212 = vpack.c.b16 %v181, %v180
    %v213 = vpack.c.b16 %v183, %v182
    %v214 = vpack.c.b16 %v185, %v184
    %v215 = vpack.c.b16 %v187, %v186
    %v216 = vpack.c.b16 %v189, %v188
    %v217 = vpack.c.b16 %v191, %v190
    %v218 = vpack.c.b16 %v193, %v192
    %v219 = vpack.c.b16 %v195, %v194
    %v220 = vpack.c.b16 %v197, %v196
    %v221 = vpack.c.b16 %v199, %v198
    %v222 = vpack.c.b16 %v201, %v200
    %v223 = vpack.c.b16 %v203, %v202
    %v224 = vpack.c.b16 %v205, %v204
    %v225 = vpack.c.b16 %v207, %v206
    %v226 = vpack.c.b16 %v209, %v208
    %v227 = vpack.c.b16 %v211, %v210
    %244 = vmatpush.bf16.msra.mxu0 %v219
    %245 = vmatpush.bf16.msra.mxu0 %v218
    %246 = vmatpush.bf16.msra.mxu0 %v217
    %247 = vmatpush.bf16.msra.mxu0 %v216
    %248 = vmatpush.bf16.msra.mxu0 %v215
    %249 = vmatpush.bf16.msra.mxu0 %v214
    %250 = vmatpush.bf16.msra.mxu0 %v213
    %251 = vmatpush.bf16.msra.mxu0 %v212
    %252 = vmatmul.bf16.gmra.mxu0 %v110
    %v253 = vpop.f32.mrf.mxu0
    %v254 = vadd.f32 %v146, %v253
    %v255 = vpop.f32.mrf.mxu0
    %256 = vdwg.mxu0
    %257 = vmatpush.bf16.msra.mxu0 %v227
    %258 = vmatpush.bf16.msra.mxu0 %v226
    %259 = vmatpush.bf16.msra.mxu0 %v225
    %260 = vmatpush.bf16.msra.mxu0 %v224
    %261 = vmatpush.bf16.msra.mxu0 %v223
    %262 = vmatpush.bf16.msra.mxu0 %v222
    %263 = vmatpush.bf16.msra.mxu0 %v221
    %264 = vmatpush.bf16.msra.mxu0 %v220
    %265 = vmatmul.bf16.gmra.mxu0 %v111
    %v266 = vpop.f32.mrf.mxu0
    %v267 = vadd.f32 %v254, %v266
    %v268 = vpop.f32.mrf.mxu0
    %269 = vdwg.mxu0
    %vm270 = vcmask 261120
    %271 = vst.msk [vmem:[#allocation2] sm:$0xff] %vm270, %v267
    // Predicated region
    $region22: #{skin_condition_model.1} parent=1 // pred_check
      _
    $region23: #{skin_condition_model.1} parent=1 // pred_check_branch
      %273 = sbr.rel (0) target = $region25
    $region24: #{skin_condition_model.1} parent=1 // pred_region
      %275 = vsyncadd [#allocation3], 0
      %s277 = sshll.u32 [#allocation2], 4
      %s278 = int_to_ptr.vmem [resolvable:$true] %s277
      %s279 = sshll.u32 %s5, 4
      %s280 = int_to_ptr.hbm [resolvable:$true] %s279
      %282 = dma.vmem_to_hbm [thread:$0]  %s278, 128, %s280, [#allocation3]
    $region25: #{skin_condition_model.1} parent=1 // pred_fallthru
      _
    // Predicated region
    $region26: #{skin_condition_model.1} parent=1 // pred_check
      _
    $region27: #{skin_condition_model.1} parent=1 // pred_check_branch
      %284 = sbr.rel (0) target = $region29
    $region28: #{skin_condition_model.1} parent=1 // pred_region
      %286 = dma.done [#allocation3], 128
    $region29: #{skin_condition_model.1} parent=1 // pred_fallthru
      _
    %287 = vsyncpa [#allocation3], 1

</llo_original>
